<compile_context>
chip_gen: v6e
topology: v6e:2x2x1
jax: 0.10.0
libtpu: 0.0.40
codegen_flags: <defaults>
</compile_context>

<pallas_src>
import math

import jax
import jax.numpy as jnp
from jax.experimental import pallas as pl
from jax.experimental.pallas import tpu as pltpu


def _linear_kernel(x_ref, wt_ref, b_ref, o_ref):
    # x_ref: (tm, tk)  wt_ref: (tk, tn)  b_ref: (1, tn)  o_ref: (tm, tn) f32
    k = pl.program_id(2)

    @pl.when(k == 0)
    def _init():
        o_ref[...] = jnp.zeros_like(o_ref)

    # Plain (M,K)x(K,N) contraction -> native MXU matmul, no on-chip transpose.
    o_ref[...] += jnp.dot(x_ref[...], wt_ref[...],
                          preferred_element_type=jnp.float32)

    @pl.when(k == pl.num_programs(2) - 1)
    def _finalize():
        o_ref[...] += b_ref[...]


def _round_up(x, m):
    return ((x + m - 1) // m) * m


def _divisor_tile(dim, cap, align):
    """Largest multiple of `align` that is <= cap and divides dim, or None."""
    t = (cap // align) * align
    while t >= align:
        if dim % t == 0:
            return t
        t -= align
    return None


def _vmem_budget_bytes():
    """~75% of this generation's VMEM (v5e/v6e: 128 MiB, v7x: 64 MiB)."""
    try:
        cap = int(pltpu.get_tpu_info().vmem_capacity_bytes)
    except Exception:
        cap = 64 << 20  # conservative fallback (v7x-sized VMEM)
    return max(32 << 20, int(0.75 * cap))


def prepare_linear_params(weight, bias):
    """One-time parameter prep (call OUTSIDE jit for static weights):
    torch-layout (O, D) weight -> (D, O) so the kernel contraction needs no
    on-chip transpose; bias -> (1, O) row."""
    weight = jnp.asarray(weight, jnp.float32)
    bias = jnp.asarray(bias, jnp.float32)
    return weight.T, bias.reshape(1, -1)


def linear_regression_forward(x, weight_t, bias_2d, *, force_pallas=False):
    """x: (B, ...); weight_t: (D, O) pre-transposed; bias_2d: (1, O).
    Returns (B, O) f32 == nn.Linear(D, O)(x.view(B, -1))."""
    B = x.shape[0]
    D = math.prod(x.shape[1:])          # static Python int (jit-safe)
    Dw, O = weight_t.shape
    assert Dw == D and bias_2d.shape == (1, O)

    x2d = x.reshape(B, D).astype(jnp.float32)   # == torch .view(B, -1)

    # ---- per-generation tile caps & VMEM budget ---------------------------
    budget = _vmem_budget_bytes()
    tm_cap, tn_cap = 512, 512
    tk_cap = 2048 if budget >= (80 << 20) else 1024   # v5e/v6e vs v7x

    # M / N remainders are safe (OOB output writes are dropped), so these only
    # need alignment, not divisibility.
    tm = B if B <= tm_cap else (_divisor_tile(B, tm_cap, 8) or tm_cap)
    tn = O if O <= tn_cap else (_divisor_tile(O, tn_cap, 128) or tn_cap)

    # K remainders are NOT safe: tk must divide the (possibly padded) D.
    if D <= tk_cap:
        tk, D_pad = D, D
    else:
        tk = _divisor_tile(D, tk_cap, 128)
        if tk is None:
            tk = tk_cap
            D_pad = _round_up(D, tk)     # zero-pad contraction axis
        else:
            D_pad = D
    if D_pad != D:
        x2d = jnp.pad(x2d, ((0, 0), (0, D_pad - D)))
        weight_t = jnp.pad(weight_t, ((0, D_pad - D), (0, 0)))

    # v7x megacore: give the second TensorCore work when both parallel axes
    # would otherwise have extent 1 and the batch is splittable.
    if pl.cdiv(B, tm) == 1 and pl.cdiv(O, tn) == 1 and B >= 16:
        tm = max(8, _round_up((B + 1) // 2, 8))

    grid = (pl.cdiv(B, tm), pl.cdiv(O, tn), pl.cdiv(D_pad, tk))

    # Degenerate GEMV-ish shapes: fixed pallas_call/DMA overhead dwarfs the
    # math -- let XLA handle it (the demo forces the Pallas path instead).
    if (not force_pallas and tuple(int(g) for g in grid) == (1, 1, 1)
            and B * O * D < (1 << 22)):
        return x2d @ weight_t + bias_2d

    # Double-buffered x / weight / bias / output tiles, f32, 2x headroom.
    est = 4 * 2 * (tm * tk + tk * tn + tn + tm * tn)
    vmem_limit = int(min(budget, max(2 * est, 16 << 20)))

    return pl.pallas_call(
        _linear_kernel,
        out_shape=jax.ShapeDtypeStruct((B, O), jnp.float32),
        grid_spec=pltpu.PrefetchScalarGridSpec(
            num_scalar_prefetch=0,
            grid=grid,
            in_specs=[
                pl.BlockSpec((tm, tk), lambda i, j, k: (i, k)),   # x2d
                pl.BlockSpec((tk, tn), lambda i, j, k: (k, j)),   # weight_t
                pl.BlockSpec((1, tn), lambda i, j, k: (0, j)),    # bias row
            ],
            out_specs=pl.BlockSpec((tm, tn), lambda i, j, k: (i, j)),
        ),
        compiler_params=pltpu.CompilerParams(
            dimension_semantics=("parallel", "parallel", "arbitrary"),
            vmem_limit_bytes=vmem_limit,
        ),
    )(x2d, weight_t, bias_2d)


if __name__ == "__main__":
    # Small shapes consistent with the module: batch=2, channels=4, spatial=16
    # -> input_dim = 4*16*16 = 1024, output_dim = 1 (nn.Linear default).
    B, C, H, W = 2, 4, 16, 16
    D = C * H * W
    O = 1

    key = jax.random.PRNGKey(0)
    kx, kw, kb = jax.random.split(key, 3)

    x = jax.random.normal(kx, (B, C, H, W), dtype=jnp.float32)
    bound = 1.0 / math.sqrt(D)   # nn.Linear default init range
    weight = jax.random.uniform(kw, (O, D), minval=-bound, maxval=bound,
                                dtype=jnp.float32)
    bias = jax.random.uniform(kb, (O,), minval=-bound, maxval=bound,
                              dtype=jnp.float32)

    # Hoisted one-time parameter prep (transpose to (D, O)) -- outside jit.
    weight_t, bias_2d = prepare_linear_params(weight, bias)

    # force_pallas=True so the demo exercises the Pallas kernel even at this
    # degenerate (grid == (1,1,1)) size.
    fwd = jax.jit(lambda xx, wt, bb: linear_regression_forward(
        xx, wt, bb, force_pallas=True))
    y = fwd(x, weight_t, bias_2d)
    jax.block_until_ready(y)

    # Cross-check against pure-JAX reference of the original module.
    y_ref = x.reshape(B, -1) @ weight.T + bias
    assert y.shape == (B, O)
    assert jnp.allclose(y, y_ref, atol=1e-4, rtol=1e-4)

    print("KERNEL_OK")
</pallas_src>

<mosaic_0001>
module attributes {stable_mosaic.version = 11 : i64} {
  func.func @_linear_kernel(%arg0: i32, %arg1: i32, %arg2: i32, %arg3: memref<2x1024xf32, #tpu.memory_space<vmem>>, %arg4: memref<1024x1xf32, #tpu.memory_space<vmem>>, %arg5: memref<1x1xf32, #tpu.memory_space<vmem>>, %arg6: memref<2x1xf32, #tpu.memory_space<vmem>>) attributes {dimension_semantics = [#tpu.dimension_semantics<parallel>, #tpu.dimension_semantics<parallel>, #tpu.dimension_semantics<arbitrary>], iteration_bounds = array<i64: 1, 1, 1>, scalar_prefetch = 0 : i64, scratch_operands = 0 : i64, tpu.core_type = #tpu.core_type<tc>, window_params = [{transform_indices = @transform_0, window_bounds = array<i64: 2, 1024>}, {transform_indices = @transform_1, window_bounds = array<i64: 1024, 1>}, {transform_indices = @transform_2, window_bounds = array<i64: 1, 1>}, {transform_indices = @transform_3, window_bounds = array<i64: 2, 1>}]} {
    %c0_i32 = arith.constant 0 : i32
    %0 = arith.cmpi eq, %arg2, %c0_i32 : i32
    %1 = arith.extui %0 : i1 to i32
    %c0_i32_0 = arith.constant 0 : i32
    %2 = arith.cmpi ne, %1, %c0_i32_0 : i32
    scf.if %2 {
      %cst_10 = arith.constant 0.000000e+00 : f32
      %12 = vector.broadcast %cst_10 : f32 to vector<2x1xf32>
      %c0_11 = arith.constant 0 : index
      %c0_12 = arith.constant 0 : index
      %13 = vector.load %arg6[%c0_11, %c0_12] : memref<2x1xf32, #tpu.memory_space<vmem>>, vector<2x1xf32>
      tpu.vector_store %arg6[%c0_11, %c0_12], %12 {strides = array<i32>} : memref<2x1xf32, #tpu.memory_space<vmem>>, vector<2x1xf32>,
    } else {
    }
    %c0 = arith.constant 0 : index
    %c0_1 = arith.constant 0 : index
    %3 = vector.load %arg6[%c0, %c0_1] : memref<2x1xf32, #tpu.memory_space<vmem>>, vector<2x1xf32>
    %c0_2 = arith.constant 0 : index
    %c0_3 = arith.constant 0 : index
    %4 = vector.load %arg3[%c0_2, %c0_3] : memref<2x1024xf32, #tpu.memory_space<vmem>>, vector<2x1024xf32>
    %c0_4 = arith.constant 0 : index
    %c0_5 = arith.constant 0 : index
    %5 = vector.load %arg4[%c0_4, %c0_5] : memref<1024x1xf32, #tpu.memory_space<vmem>>, vector<1024x1xf32>
    %cst = arith.constant dense<0.000000e+00> : vector<2x1xf32>
    %6 = tpu.matmul %4, %5, %cst {dimension_numbers = #tpu.dot_dimension_numbers<[1], [0], [0], [1], [0, 0, 1, 1], [], []>} : vector<2x1024xf32>, vector<1024x1xf32>, vector<2x1xf32> -> vector<2x1xf32>
    %7 = arith.addf %3, %6 : vector<2x1xf32>
    %c0_6 = arith.constant 0 : index
    %c0_7 = arith.constant 0 : index
    %8 = vector.load %arg6[%c0_6, %c0_7] : memref<2x1xf32, #tpu.memory_space<vmem>>, vector<2x1xf32>
    tpu.vector_store %arg6[%c0_6, %c0_7], %7 {strides = array<i32>} : memref<2x1xf32, #tpu.memory_space<vmem>>, vector<2x1xf32>,
    %c0_i32_8 = arith.constant 0 : i32
    %9 = arith.cmpi eq, %arg2, %c0_i32_8 : i32
    %10 = arith.extui %9 : i1 to i32
    %c0_i32_9 = arith.constant 0 : i32
    %11 = arith.cmpi ne, %10, %c0_i32_9 : i32
    scf.if %11 {
      %c0_10 = arith.constant 0 : index
      %c0_11 = arith.constant 0 : index
      %12 = vector.load %arg6[%c0_10, %c0_11] : memref<2x1xf32, #tpu.memory_space<vmem>>, vector<2x1xf32>
      %c0_12 = arith.constant 0 : index
      %c0_13 = arith.constant 0 : index
      %13 = vector.load %arg5[%c0_12, %c0_13] : memref<1x1xf32, #tpu.memory_space<vmem>>, vector<1x1xf32>
      %14 = vector.broadcast %13 : vector<1x1xf32> to vector<2x1xf32>
      %15 = arith.addf %12, %14 : vector<2x1xf32>
      %c0_14 = arith.constant 0 : index
      %c0_15 = arith.constant 0 : index
      %16 = vector.load %arg6[%c0_14, %c0_15] : memref<2x1xf32, #tpu.memory_space<vmem>>, vector<2x1xf32>
      tpu.vector_store %arg6[%c0_14, %c0_15], %15 {strides = array<i32>} : memref<2x1xf32, #tpu.memory_space<vmem>>, vector<2x1xf32>,
    } else {
    }
    return
  }
  func.func @transform_0(%arg0: i32, %arg1: i32, %arg2: i32) -> (i32, i32) {
    %c0_i32 = arith.constant 0 : i32
    return %arg0, %arg2 : i32, i32
  }
  func.func @transform_1(%arg0: i32, %arg1: i32, %arg2: i32) -> (i32, i32) {
    %c0_i32 = arith.constant 0 : i32
    return %arg2, %arg1 : i32, i32
  }
  func.func @transform_2(%arg0: i32, %arg1: i32, %arg2: i32) -> (i32, i32) {
    %c0_i32 = arith.constant 0 : i32
    %c0_i32_0 = arith.constant 0 : i32
    return %c0_i32, %arg1 : i32, i32
  }
  func.func @transform_3(%arg0: i32, %arg1: i32, %arg2: i32) -> (i32, i32) {
    %c0_i32 = arith.constant 0 : i32
    return %arg0, %arg1 : i32, i32
  }
}

</mosaic_0001>

<llo_original>
// kernel: _lambda_.1
$region0: #{_lambda_.1}
  #allocation0 [shape = 'u32[]', space=smem, size = 0x4, offset = 0x4, fixed_abs, tag = 'smem constant byte address 0x4 - core index']
  #allocation1 [shape = 'u32[144,128]{1,0:T(1,128)}', space=vmem, size = 0x12000, scoped, tag = 'internal scratch']
  #allocation2 [shape = 'f32[1,1]{1,0:T(1,128)S(1)}', space=vmem, size = 0x200, scoped, tag = 'scoped memory for _lambda_.1']
  %s0 = inlined_call_operand.vmem [shape: f32[2,1024], index: 0, kind: input, shape index: {}]
  %s1 = inlined_call_operand.vmem [shape: f32[1024,1], index: 1, kind: input, shape index: {}]
  %s2 = inlined_call_operand.<no memory space> [shape: f32[1,1], index: 2, kind: input, shape index: {}]
  %s3 = inlined_call_operand.vmem [shape: f32[2,1], index: 3, kind: output, shape index: {}]
  %s4 = sld [smem:[#allocation0]]
  $region30: #{_lambda_.1} parent=0
    _
  %s6 = ssub.s32 1, %s4
  %s7 = scalar_select 0, %s6, %s4
  %v8 = vstv %s2
  %9 = vst [vmem:[#allocation2] sm:$0x1] %v8
  // Predicated region
  $region2: #{_lambda_.1} parent=0 // pred_check
    _
  $region3: #{_lambda_.1} parent=0 // pred_check_branch
    %11 = sbr.rel (0) target = $region5
  $region4: #{_lambda_.1} parent=0 // pred_region
    _
  $region5: #{_lambda_.1} parent=0 // pred_fallthru
    _
  // Predicated region
  $region6: #{_lambda_.1} parent=0 // pred_check
    _
  $region7: #{_lambda_.1} parent=0 // pred_check_branch
    %13 = sbr.rel (0) target = $region9
  $region8: #{_lambda_.1} parent=0 // pred_region
    _
  $region9: #{_lambda_.1} parent=0 // pred_fallthru
    _
  // Predicated region
  $region10: #{_lambda_.1} parent=0 // pred_check
    _
  $region11: #{_lambda_.1} parent=0 // pred_check_branch
    %15 = sbr.rel (0) target = $region13
  $region12: #{_lambda_.1} parent=0 // pred_region
    _
  $region13: #{_lambda_.1} parent=0 // pred_fallthru
    _
  %p16 = scmp.eq.s32.totalorder 0, 0
  // Predicated region
  $region14: #{_lambda_.1} parent=0 // pred_check
    %p17 = pneg %p16
  $region15: #{_lambda_.1} parent=0 // pred_check_branch
    %19 = sbr.rel (%p17) target = $region17
  $region16: #{_lambda_.1} parent=0 // pred_region
    %vm20 = vcmask 1024
    %21 = vst.msk [vmem:[%s3] sm:$0x3] %vm20, 0.0
  $region17: #{_lambda_.1} parent=0 // pred_fallthru
    _
  %v22 = vld [vmem:[%s3] sm:$0x3]
  %v23 = vld [vmem:[%s0] sm:$0xff]
  %v24 = vld [vmem:[%s0 + $0x8] sm:$0xff]
  %v25 = vld [vmem:[%s1] sm:$0xff]
  %v26 = vld [vmem:[%s1 + $0x8] sm:$0xff]
  %v27 = vld [vmem:[%s1 + $0x10] sm:$0xff]
  %v28 = vld [vmem:[%s1 + $0x18] sm:$0xff]
  %v29 = vld [vmem:[%s1 + $0x20] sm:$0xff]
  %v30 = vld [vmem:[%s1 + $0x28] sm:$0xff]
  %v31 = vld [vmem:[%s1 + $0x30] sm:$0xff]
  %v32 = vld [vmem:[%s1 + $0x38] sm:$0xff]
  %v33 = vld [vmem:[%s1 + $0x40] sm:$0xff]
  %v34 = vld [vmem:[%s1 + $0x48] sm:$0xff]
  %v35 = vld [vmem:[%s1 + $0x50] sm:$0xff]
  %v36 = vld [vmem:[%s1 + $0x58] sm:$0xff]
  %v37 = vld [vmem:[%s1 + $0x60] sm:$0xff]
  %v38 = vld [vmem:[%s1 + $0x68] sm:$0xff]
  %v39 = vld [vmem:[%s1 + $0x70] sm:$0xff]
  %v40 = vld [vmem:[%s1 + $0x78] sm:$0xff]
  %v41 = vld [vmem:[%s1 + $0x80] sm:$0xff]
  %v42 = vld [vmem:[%s1 + $0x88] sm:$0xff]
  %v43 = vld [vmem:[%s1 + $0x90] sm:$0xff]
  %v44 = vld [vmem:[%s1 + $0x98] sm:$0xff]
  %v45 = vld [vmem:[%s1 + $0xa0] sm:$0xff]
  %v46 = vld [vmem:[%s1 + $0xa8] sm:$0xff]
  %v47 = vld [vmem:[%s1 + $0xb0] sm:$0xff]
  %v48 = vld [vmem:[%s1 + $0xb8] sm:$0xff]
  %v49 = vld [vmem:[%s1 + $0xc0] sm:$0xff]
  %v50 = vld [vmem:[%s1 + $0xc8] sm:$0xff]
  %v51 = vld [vmem:[%s1 + $0xd0] sm:$0xff]
  %v52 = vld [vmem:[%s1 + $0xd8] sm:$0xff]
  %v53 = vld [vmem:[%s1 + $0xe0] sm:$0xff]
  %v54 = vld [vmem:[%s1 + $0xe8] sm:$0xff]
  %v55 = vld [vmem:[%s1 + $0xf0] sm:$0xff]
  %v56 = vld [vmem:[%s1 + $0xf8] sm:$0xff]
  %v57 = vld [vmem:[%s1 + $0x100] sm:$0xff]
  %v58 = vld [vmem:[%s1 + $0x108] sm:$0xff]
  %v59 = vld [vmem:[%s1 + $0x110] sm:$0xff]
  %v60 = vld [vmem:[%s1 + $0x118] sm:$0xff]
  %v61 = vld [vmem:[%s1 + $0x120] sm:$0xff]
  %v62 = vld [vmem:[%s1 + $0x128] sm:$0xff]
  %v63 = vld [vmem:[%s1 + $0x130] sm:$0xff]
  %v64 = vld [vmem:[%s1 + $0x138] sm:$0xff]
  %v65 = vld [vmem:[%s1 + $0x140] sm:$0xff]
  %v66 = vld [vmem:[%s1 + $0x148] sm:$0xff]
  %v67 = vld [vmem:[%s1 + $0x150] sm:$0xff]
  %v68 = vld [vmem:[%s1 + $0x158] sm:$0xff]
  %v69 = vld [vmem:[%s1 + $0x160] sm:$0xff]
  %v70 = vld [vmem:[%s1 + $0x168] sm:$0xff]
  %v71 = vld [vmem:[%s1 + $0x170] sm:$0xff]
  %v72 = vld [vmem:[%s1 + $0x178] sm:$0xff]
  %v73 = vld [vmem:[%s1 + $0x180] sm:$0xff]
  %v74 = vld [vmem:[%s1 + $0x188] sm:$0xff]
  %v75 = vld [vmem:[%s1 + $0x190] sm:$0xff]
  %v76 = vld [vmem:[%s1 + $0x198] sm:$0xff]
  %v77 = vld [vmem:[%s1 + $0x1a0] sm:$0xff]
  %v78 = vld [vmem:[%s1 + $0x1a8] sm:$0xff]
  %v79 = vld [vmem:[%s1 + $0x1b0] sm:$0xff]
  %v80 = vld [vmem:[%s1 + $0x1b8] sm:$0xff]
  %v81 = vld [vmem:[%s1 + $0x1c0] sm:$0xff]
  %v82 = vld [vmem:[%s1 + $0x1c8] sm:$0xff]
  %v83 = vld [vmem:[%s1 + $0x1d0] sm:$0xff]
  %v84 = vld [vmem:[%s1 + $0x1d8] sm:$0xff]
  %v85 = vld [vmem:[%s1 + $0x1e0] sm:$0xff]
  %v86 = vld [vmem:[%s1 + $0x1e8] sm:$0xff]
  %v87 = vld [vmem:[%s1 + $0x1f0] sm:$0xff]
  %v88 = vld [vmem:[%s1 + $0x1f8] sm:$0xff]
  %v89 = vld [vmem:[%s1 + $0x200] sm:$0xff]
  %v90 = vld [vmem:[%s1 + $0x208] sm:$0xff]
  %v91 = vld [vmem:[%s1 + $0x210] sm:$0xff]
  %v92 = vld [vmem:[%s1 + $0x218] sm:$0xff]
  %v93 = vld [vmem:[%s1 + $0x220] sm:$0xff]
  %v94 = vld [vmem:[%s1 + $0x228] sm:$0xff]
  %v95 = vld [vmem:[%s1 + $0x230] sm:$0xff]
  %v96 = vld [vmem:[%s1 + $0x238] sm:$0xff]
  %v97 = vld [vmem:[%s1 + $0x240] sm:$0xff]
  %v98 = vld [vmem:[%s1 + $0x248] sm:$0xff]
  %v99 = vld [vmem:[%s1 + $0x250] sm:$0xff]
  %v100 = vld [vmem:[%s1 + $0x258] sm:$0xff]
  %v101 = vld [vmem:[%s1 + $0x260] sm:$0xff]
  %v102 = vld [vmem:[%s1 + $0x268] sm:$0xff]
  %v103 = vld [vmem:[%s1 + $0x270] sm:$0xff]
  %v104 = vld [vmem:[%s1 + $0x278] sm:$0xff]
  %v105 = vld [vmem:[%s1 + $0x280] sm:$0xff]
  %v106 = vld [vmem:[%s1 + $0x288] sm:$0xff]
  %v107 = vld [vmem:[%s1 + $0x290] sm:$0xff]
  %v108 = vld [vmem:[%s1 + $0x298] sm:$0xff]
  %v109 = vld [vmem:[%s1 + $0x2a0] sm:$0xff]
  %v110 = vld [vmem:[%s1 + $0x2a8] sm:$0xff]
  %v111 = vld [vmem:[%s1 + $0x2b0] sm:$0xff]
  %v112 = vld [vmem:[%s1 + $0x2b8] sm:$0xff]
  %v113 = vld [vmem:[%s1 + $0x2c0] sm:$0xff]
  %v114 = vld [vmem:[%s1 + $0x2c8] sm:$0xff]
  %v115 = vld [vmem:[%s1 + $0x2d0] sm:$0xff]
  %v116 = vld [vmem:[%s1 + $0x2d8] sm:$0xff]
  %v117 = vld [vmem:[%s1 + $0x2e0] sm:$0xff]
  %v118 = vld [vmem:[%s1 + $0x2e8] sm:$0xff]
  %v119 = vld [vmem:[%s1 + $0x2f0] sm:$0xff]
  %v120 = vld [vmem:[%s1 + $0x2f8] sm:$0xff]
  %v121 = vld [vmem:[%s1 + $0x300] sm:$0xff]
  %v122 = vld [vmem:[%s1 + $0x308] sm:$0xff]
  %v123 = vld [vmem:[%s1 + $0x310] sm:$0xff]
  %v124 = vld [vmem:[%s1 + $0x318] sm:$0xff]
  %v125 = vld [vmem:[%s1 + $0x320] sm:$0xff]
  %v126 = vld [vmem:[%s1 + $0x328] sm:$0xff]
  %v127 = vld [vmem:[%s1 + $0x330] sm:$0xff]
  %v128 = vld [vmem:[%s1 + $0x338] sm:$0xff]
  %v129 = vld [vmem:[%s1 + $0x340] sm:$0xff]
  %v130 = vld [vmem:[%s1 + $0x348] sm:$0xff]
  %v131 = vld [vmem:[%s1 + $0x350] sm:$0xff]
  %v132 = vld [vmem:[%s1 + $0x358] sm:$0xff]
  %v133 = vld [vmem:[%s1 + $0x360] sm:$0xff]
  %v134 = vld [vmem:[%s1 + $0x368] sm:$0xff]
  %v135 = vld [vmem:[%s1 + $0x370] sm:$0xff]
  %v136 = vld [vmem:[%s1 + $0x378] sm:$0xff]
  %v137 = vld [vmem:[%s1 + $0x380] sm:$0xff]
  %v138 = vld [vmem:[%s1 + $0x388] sm:$0xff]
  %v139 = vld [vmem:[%s1 + $0x390] sm:$0xff]
  %v140 = vld [vmem:[%s1 + $0x398] sm:$0xff]
  %v141 = vld [vmem:[%s1 + $0x3a0] sm:$0xff]
  %v142 = vld [vmem:[%s1 + $0x3a8] sm:$0xff]
  %v143 = vld [vmem:[%s1 + $0x3b0] sm:$0xff]
  %v144 = vld [vmem:[%s1 + $0x3b8] sm:$0xff]
  %v145 = vld [vmem:[%s1 + $0x3c0] sm:$0xff]
  %v146 = vld [vmem:[%s1 + $0x3c8] sm:$0xff]
  %v147 = vld [vmem:[%s1 + $0x3d0] sm:$0xff]
  %v148 = vld [vmem:[%s1 + $0x3d8] sm:$0xff]
  %v149 = vld [vmem:[%s1 + $0x3e0] sm:$0xff]
  %v150 = vld [vmem:[%s1 + $0x3e8] sm:$0xff]
  %v151 = vld [vmem:[%s1 + $0x3f0] sm:$0xff]
  %v152 = vld [vmem:[%s1 + $0x3f8] sm:$0xff]
  %v155 = vcombine.high %v23, %v23
  %v157 = vunpack.c.l.s4 1983009808
  %v158 = vunpack.c.0.s8 %v157
  %v159 = vlaneseq
  %v160 = vshrl.u32 %v159, 7
  %v161 = vsub.s32 %v158, %v160
  %v162 = vrot.slane %v23, %v161
  %v164 = vunpack.c.l.s4 1983009808
  %v165 = vunpack.c.0.s8 %v164
  %v166 = vlaneseq
  %v167 = vshrl.u32 %v166, 7
  %v168 = vsub.s32 %v165, %v167
  %v169 = vrot.slane %v155, %v168
  %v170 = vcombine.high %v162, %v162
  %v171 = vcombine.high %v169, %v169
  %v172 = vcombine.high %v24, %v24
  %v174 = vunpack.c.l.s4 1983009808
  %v175 = vunpack.c.0.s8 %v174
  %v176 = vlaneseq
  %v177 = vshrl.u32 %v176, 7
  %v178 = vsub.s32 %v175, %v177
  %v179 = vrot.slane %v24, %v178
  %v181 = vunpack.c.l.s4 1983009808
  %v182 = vunpack.c.0.s8 %v181
  %v183 = vlaneseq
  %v184 = vshrl.u32 %v183, 7
  %v185 = vsub.s32 %v182, %v184
  %v186 = vrot.slane %v172, %v185
  %v187 = vcombine.high %v179, %v179
  %v188 = vcombine.high %v186, %v186
  %197 = vmatprep.subr.mxu0 0.0
  %198 = vmatpush1.msra.mxu0 %v40
  %199 = vmatprep.subr.mxu0 0.0
  %200 = vmatpush1.msra.mxu0 %v39
  %201 = vmatprep.subr.mxu0 0.0
  %202 = vmatpush1.msra.mxu0 %v38
  %203 = vmatprep.subr.mxu0 0.0
  %204 = vmatpush1.msra.mxu0 %v37
  %205 = vmatprep.subr.mxu0 0.0
  %206 = vmatpush1.msra.mxu0 %v36
  %207 = vmatprep.subr.mxu0 0.0
  %208 = vmatpush1.msra.mxu0 %v35
  %209 = vmatprep.subr.mxu0 0.0
  %210 = vmatpush1.msra.mxu0 %v34
  %211 = vmatprep.subr.mxu0 0.0
  %212 = vmatpush1.msra.mxu0 %v33
  %213 = vmatprep.subr.mxu0 0.0
  %214 = vmatpush1.msra.mxu0 %v32
  %215 = vmatprep.subr.mxu0 0.0
  %216 = vmatpush1.msra.mxu0 %v31
  %217 = vmatprep.subr.mxu0 0.0
  %218 = vmatpush1.msra.mxu0 %v30
  %219 = vmatprep.subr.mxu0 0.0
  %220 = vmatpush1.msra.mxu0 %v29
  %221 = vmatprep.subr.mxu0 0.0
  %222 = vmatpush1.msra.mxu0 %v28
  %223 = vmatprep.subr.mxu0 0.0
  %224 = vmatpush1.msra.mxu0 %v27
  %225 = vmatprep.subr.mxu0 0.0
  %226 = vmatpush1.msra.mxu0 %v26
  %227 = vmatprep.subr.mxu0 0.0
  %228 = vmatpush1.msra.mxu0 %v25
  %229 = vmatprep.subr.mxu0 0.0
  %230 = vmatpush2.msra.mxu0 %v56
  %231 = vmatprep.subr.mxu0 0.0
  %232 = vmatpush2.msra.mxu0 %v55
  %233 = vmatprep.subr.mxu0 0.0
  %234 = vmatpush2.msra.mxu0 %v54
  %235 = vmatprep.subr.mxu0 0.0
  %236 = vmatpush2.msra.mxu0 %v53
  %237 = vmatprep.subr.mxu0 0.0
  %238 = vmatpush2.msra.mxu0 %v52
  %239 = vmatprep.subr.mxu0 0.0
  %240 = vmatpush2.msra.mxu0 %v51
  %241 = vmatprep.subr.mxu0 0.0
  %242 = vmatpush2.msra.mxu0 %v50
  %243 = vmatprep.subr.mxu0 0.0
  %244 = vmatpush2.msra.mxu0 %v49
  %245 = vmatprep.subr.mxu0 0.0
  %246 = vmatpush2.msra.mxu0 %v48
  %247 = vmatprep.subr.mxu0 0.0
  %248 = vmatpush2.msra.mxu0 %v47
  %249 = vmatprep.subr.mxu0 0.0
  %250 = vmatpush2.msra.mxu0 %v46
  %251 = vmatprep.subr.mxu0 0.0
  %252 = vmatpush2.msra.mxu0 %v45
  %253 = vmatprep.subr.mxu0 0.0
  %254 = vmatpush2.msra.mxu0 %v44
  %255 = vmatprep.subr.mxu0 0.0
  %256 = vmatpush2.msra.mxu0 %v43
  %257 = vmatprep.subr.mxu0 0.0
  %258 = vmatpush2.msra.mxu0 %v42
  %259 = vmatprep.subr.mxu0 0.0
  %260 = vmatpush2.msra.mxu0 %v41
  %261 = vmatprep.mubr.f32.mxu0 %v170
  %262 = vmatmul.mubr.f32.gmra.mxu0 %v162
  %v263 = vpop.f32.mrf.mxu0
  %v264 = vadd.f32 0.0, %v263
  %v265 = vpop.f32.mrf.mxu0
  %266 = vdwg.mxu0
  %267 = vmatprep.subr.mxu0 0.0
  %268 = vmatpush1.msra.mxu0 %v72
  %269 = vmatprep.subr.mxu0 0.0
  %270 = vmatpush1.msra.mxu0 %v71
  %271 = vmatprep.subr.mxu0 0.0
  %272 = vmatpush1.msra.mxu0 %v70
  %273 = vmatprep.subr.mxu0 0.0
  %274 = vmatpush1.msra.mxu0 %v69
  %275 = vmatprep.subr.mxu0 0.0
  %276 = vmatpush1.msra.mxu0 %v68
  %277 = vmatprep.subr.mxu0 0.0
  %278 = vmatpush1.msra.mxu0 %v67
  %279 = vmatprep.subr.mxu0 0.0
  %280 = vmatpush1.msra.mxu0 %v66
  %281 = vmatprep.subr.mxu0 0.0
  %282 = vmatpush1.msra.mxu0 %v65
  %283 = vmatprep.subr.mxu0 0.0
  %284 = vmatpush1.msra.mxu0 %v64
  %285 = vmatprep.subr.mxu0 0.0
  %286 = vmatpush1.msra.mxu0 %v63
  %287 = vmatprep.subr.mxu0 0.0
  %288 = vmatpush1.msra.mxu0 %v62
  %289 = vmatprep.subr.mxu0 0.0
  %290 = vmatpush1.msra.mxu0 %v61
  %291 = vmatprep.subr.mxu0 0.0
  %292 = vmatpush1.msra.mxu0 %v60
  %293 = vmatprep.subr.mxu0 0.0
  %294 = vmatpush1.msra.mxu0 %v59
  %295 = vmatprep.subr.mxu0 0.0
  %296 = vmatpush1.msra.mxu0 %v58
  %297 = vmatprep.subr.mxu0 0.0
  %298 = vmatpush1.msra.mxu0 %v57
  %299 = vmatprep.subr.mxu0 0.0
  %300 = vmatpush2.msra.mxu0 %v88
  %301 = vmatprep.subr.mxu0 0.0
  %302 = vmatpush2.msra.mxu0 %v87
  %303 = vmatprep.subr.mxu0 0.0
  %304 = vmatpush2.msra.mxu0 %v86
  %305 = vmatprep.subr.mxu0 0.0
  %306 = vmatpush2.msra.mxu0 %v85
  %307 = vmatprep.subr.mxu0 0.0
  %308 = vmatpush2.msra.mxu0 %v84
  %309 = vmatprep.subr.mxu0 0.0
  %310 = vmatpush2.msra.mxu0 %v83
  %311 = vmatprep.subr.mxu0 0.0
  %312 = vmatpush2.msra.mxu0 %v82
  %313 = vmatprep.subr.mxu0 0.0
  %314 = vmatpush2.msra.mxu0 %v81
  %315 = vmatprep.subr.mxu0 0.0
  %316 = vmatpush2.msra.mxu0 %v80
  %317 = vmatprep.subr.mxu0 0.0
  %318 = vmatpush2.msra.mxu0 %v79
  %319 = vmatprep.subr.mxu0 0.0
  %320 = vmatpush2.msra.mxu0 %v78
  %321 = vmatprep.subr.mxu0 0.0
  %322 = vmatpush2.msra.mxu0 %v77
  %323 = vmatprep.subr.mxu0 0.0
  %324 = vmatpush2.msra.mxu0 %v76
  %325 = vmatprep.subr.mxu0 0.0
  %326 = vmatpush2.msra.mxu0 %v75
  %327 = vmatprep.subr.mxu0 0.0
  %328 = vmatpush2.msra.mxu0 %v74
  %329 = vmatprep.subr.mxu0 0.0
  %330 = vmatpush2.msra.mxu0 %v73
  %331 = vmatprep.mubr.f32.mxu0 %v171
  %332 = vmatmul.mubr.f32.gmra.mxu0 %v169
  %v333 = vpop.f32.mrf.mxu0
  %v334 = vadd.f32 %v264, %v333
  %v335 = vpop.f32.mrf.mxu0
  %336 = vdwg.mxu0
  %337 = vmatprep.subr.mxu0 0.0
  %338 = vmatpush1.msra.mxu0 %v104
  %339 = vmatprep.subr.mxu0 0.0
  %340 = vmatpush1.msra.mxu0 %v103
  %341 = vmatprep.subr.mxu0 0.0
  %342 = vmatpush1.msra.mxu0 %v102
  %343 = vmatprep.subr.mxu0 0.0
  %344 = vmatpush1.msra.mxu0 %v101
  %345 = vmatprep.subr.mxu0 0.0
  %346 = vmatpush1.msra.mxu0 %v100
  %347 = vmatprep.subr.mxu0 0.0
  %348 = vmatpush1.msra.mxu0 %v99
  %349 = vmatprep.subr.mxu0 0.0
  %350 = vmatpush1.msra.mxu0 %v98
  %351 = vmatprep.subr.mxu0 0.0
  %352 = vmatpush1.msra.mxu0 %v97
  %353 = vmatprep.subr.mxu0 0.0
  %354 = vmatpush1.msra.mxu0 %v96
  %355 = vmatprep.subr.mxu0 0.0
  %356 = vmatpush1.msra.mxu0 %v95
  %357 = vmatprep.subr.mxu0 0.0
  %358 = vmatpush1.msra.mxu0 %v94
  %359 = vmatprep.subr.mxu0 0.0
  %360 = vmatpush1.msra.mxu0 %v93
  %361 = vmatprep.subr.mxu0 0.0
  %362 = vmatpush1.msra.mxu0 %v92
  %363 = vmatprep.subr.mxu0 0.0
  %364 = vmatpush1.msra.mxu0 %v91
  %365 = vmatprep.subr.mxu0 0.0
  %366 = vmatpush1.msra.mxu0 %v90
  %367 = vmatprep.subr.mxu0 0.0
  %368 = vmatpush1.msra.mxu0 %v89
  %369 = vmatprep.subr.mxu0 0.0
  %370 = vmatpush2.msra.mxu0 %v120
  %371 = vmatprep.subr.mxu0 0.0
  %372 = vmatpush2.msra.mxu0 %v119
  %373 = vmatprep.subr.mxu0 0.0
  %374 = vmatpush2.msra.mxu0 %v118
  %375 = vmatprep.subr.mxu0 0.0
  %376 = vmatpush2.msra.mxu0 %v117
  %377 = vmatprep.subr.mxu0 0.0
  %378 = vmatpush2.msra.mxu0 %v116
  %379 = vmatprep.subr.mxu0 0.0
  %380 = vmatpush2.msra.mxu0 %v115
  %381 = vmatprep.subr.mxu0 0.0
  %382 = vmatpush2.msra.mxu0 %v114
  %383 = vmatprep.subr.mxu0 0.0
  %384 = vmatpush2.msra.mxu0 %v113
  %385 = vmatprep.subr.mxu0 0.0
  %386 = vmatpush2.msra.mxu0 %v112
  %387 = vmatprep.subr.mxu0 0.0
  %388 = vmatpush2.msra.mxu0 %v111
  %389 = vmatprep.subr.mxu0 0.0
  %390 = vmatpush2.msra.mxu0 %v110
  %391 = vmatprep.subr.mxu0 0.0
  %392 = vmatpush2.msra.mxu0 %v109
  %393 = vmatprep.subr.mxu0 0.0
  %394 = vmatpush2.msra.mxu0 %v108
  %395 = vmatprep.subr.mxu0 0.0
  %396 = vmatpush2.msra.mxu0 %v107
  %397 = vmatprep.subr.mxu0 0.0
  %398 = vmatpush2.msra.mxu0 %v106
  %399 = vmatprep.subr.mxu0 0.0
  %400 = vmatpush2.msra.mxu0 %v105
  %401 = vmatprep.mubr.f32.mxu0 %v187
  %402 = vmatmul.mubr.f32.gmra.mxu0 %v179
  %v403 = vpop.f32.mrf.mxu0
  %v404 = vadd.f32 %v334, %v403
  %v405 = vpop.f32.mrf.mxu0
  %406 = vdwg.mxu0
  %407 = vmatprep.subr.mxu0 0.0
  %408 = vmatpush1.msra.mxu0 %v136
  %409 = vmatprep.subr.mxu0 0.0
  %410 = vmatpush1.msra.mxu0 %v135
  %411 = vmatprep.subr.mxu0 0.0
  %412 = vmatpush1.msra.mxu0 %v134
  %413 = vmatprep.subr.mxu0 0.0
  %414 = vmatpush1.msra.mxu0 %v133
  %415 = vmatprep.subr.mxu0 0.0
  %416 = vmatpush1.msra.mxu0 %v132
  %417 = vmatprep.subr.mxu0 0.0
  %418 = vmatpush1.msra.mxu0 %v131
  %419 = vmatprep.subr.mxu0 0.0
  %420 = vmatpush1.msra.mxu0 %v130
  %421 = vmatprep.subr.mxu0 0.0
  %422 = vmatpush1.msra.mxu0 %v129
  %423 = vmatprep.subr.mxu0 0.0
  %424 = vmatpush1.msra.mxu0 %v128
  %425 = vmatprep.subr.mxu0 0.0
  %426 = vmatpush1.msra.mxu0 %v127
  %427 = vmatprep.subr.mxu0 0.0
  %428 = vmatpush1.msra.mxu0 %v126
  %429 = vmatprep.subr.mxu0 0.0
  %430 = vmatpush1.msra.mxu0 %v125
  %431 = vmatprep.subr.mxu0 0.0
  %432 = vmatpush1.msra.mxu0 %v124
  %433 = vmatprep.subr.mxu0 0.0
  %434 = vmatpush1.msra.mxu0 %v123
  %435 = vmatprep.subr.mxu0 0.0
  %436 = vmatpush1.msra.mxu0 %v122
  %437 = vmatprep.subr.mxu0 0.0
  %438 = vmatpush1.msra.mxu0 %v121
  %439 = vmatprep.subr.mxu0 0.0
  %440 = vmatpush2.msra.mxu0 %v152
  %441 = vmatprep.subr.mxu0 0.0
  %442 = vmatpush2.msra.mxu0 %v151
  %443 = vmatprep.subr.mxu0 0.0
  %444 = vmatpush2.msra.mxu0 %v150
  %445 = vmatprep.subr.mxu0 0.0
  %446 = vmatpush2.msra.mxu0 %v149
  %447 = vmatprep.subr.mxu0 0.0
  %448 = vmatpush2.msra.mxu0 %v148
  %449 = vmatprep.subr.mxu0 0.0
  %450 = vmatpush2.msra.mxu0 %v147
  %451 = vmatprep.subr.mxu0 0.0
  %452 = vmatpush2.msra.mxu0 %v146
  %453 = vmatprep.subr.mxu0 0.0
  %454 = vmatpush2.msra.mxu0 %v145
  %455 = vmatprep.subr.mxu0 0.0
  %456 = vmatpush2.msra.mxu0 %v144
  %457 = vmatprep.subr.mxu0 0.0
  %458 = vmatpush2.msra.mxu0 %v143
  %459 = vmatprep.subr.mxu0 0.0
  %460 = vmatpush2.msra.mxu0 %v142
  %461 = vmatprep.subr.mxu0 0.0
  %462 = vmatpush2.msra.mxu0 %v141
  %463 = vmatprep.subr.mxu0 0.0
  %464 = vmatpush2.msra.mxu0 %v140
  %465 = vmatprep.subr.mxu0 0.0
  %466 = vmatpush2.msra.mxu0 %v139
  %467 = vmatprep.subr.mxu0 0.0
  %468 = vmatpush2.msra.mxu0 %v138
  %469 = vmatprep.subr.mxu0 0.0
  %470 = vmatpush2.msra.mxu0 %v137
  %471 = vmatprep.mubr.f32.mxu0 %v188
  %472 = vmatmul.mubr.f32.gmra.mxu0 %v186
  %v473 = vpop.f32.mrf.mxu0
  %v474 = vadd.f32 %v404, %v473
  %v475 = vpop.f32.mrf.mxu0
  %476 = vdwg.mxu0
  %v477 = vadd.f32 %v22, %v474
  %vm478 = vcmask 1024
  %479 = vst.msk [vmem:[%s3] sm:$0x3] %vm478, %v477
  // Predicated region
  $region18: #{_lambda_.1} parent=0 // pred_check
    %p480 = pneg %p16
  $region19: #{_lambda_.1} parent=0 // pred_check_branch
    %482 = sbr.rel (%p480) target = $region21
  $region20: #{_lambda_.1} parent=0 // pred_region
    %v483 = vld [vmem:[%s3] sm:$0x3]
    %v484 = vld [vmem:[#allocation2] sm:$0x1]
    %v486 = vlaneseq
    %v487 = vshrl.u32 %v486, 7
    %v488 = vsub.s32 0, %v487
    %v489 = vrot.slane %v484, %v488
    %v491 = vadd.f32 %v483, %v489
    %492 = vst.msk [vmem:[%s3] sm:$0x3] %vm478, %v491
  $region21: #{_lambda_.1} parent=0 // pred_fallthru
    _
  // Predicated region
  $region22: #{_lambda_.1} parent=0 // pred_check
    _
  $region23: #{_lambda_.1} parent=0 // pred_check_branch
    %494 = sbr.rel (0) target = $region25
  $region24: #{_lambda_.1} parent=0 // pred_region
    _
  $region25: #{_lambda_.1} parent=0 // pred_fallthru
    _
  // Predicated region
  $region26: #{_lambda_.1} parent=0 // pred_check
    _
  $region27: #{_lambda_.1} parent=0 // pred_check_branch
    %496 = sbr.rel (0) target = $region29
  $region28: #{_lambda_.1} parent=0 // pred_region
    _
  $region29: #{_lambda_.1} parent=0 // pred_fallthru
    _

</llo_original>
